<compile_context>
chip_gen: v7x
topology: tpu7x:2x2x1
jax: 0.10.0
libtpu: 0.0.40
codegen_flags: <defaults>
</compile_context>

<pallas_src>
import functools

import jax
import jax.numpy as jnp
from jax import lax
from jax.experimental import pallas as pl
from jax.experimental.pallas import tpu as pltpu


# ----------------------------- kernel ---------------------------------------


def _rnn_kernel(x_ref, wih_ref, whh_ref, b_ref, h_out_ref, xw_ref, h_ref,
                *, n_sub, unroll):
    # x_ref:    (1, Tc*Bc, D)  one (batch-chunk, time-chunk): rows are t*Bc + b
    # wih_ref:  (D, H)   W_ih^T        whh_ref: (H, H)  W_hh^T
    # b_ref:    (1, H)   b_ih + b_hh (f32)
    # h_out_ref:(1, Bc, H)  lane-dense output (h at the last timestep)
    # xw_ref:   (Tc*Bc, H) f32 scratch (hoisted input projection)
    # h_ref:    (Bc, H)   f32 scratch (h carried across time-chunks)
    t_idx = pl.program_id(1)
    n_t = pl.num_programs(1)

    Bc, H = h_ref.shape
    Tc = xw_ref.shape[0] // Bc
    Bh = Bc // n_sub

    @pl.when(t_idx == 0)
    def _():
        h_ref[...] = jnp.zeros_like(h_ref)

    # Hoisted input projection + folded bias: one MXU pass over the whole
    # time-chunk, off the serial dependent chain.
    xw_ref[...] = (
        jnp.dot(x_ref[0], wih_ref[...], preferred_element_type=jnp.float32)
        + b_ref[...])

    whh = whh_ref[...]
    mxu_dt = whh.dtype

    # h stays f32 across steps (safe on v5e's f32-only VPU/EUP); only the MXU
    # operands are cast to the (bf16) compute dtype.
    h0 = tuple(h_ref[pl.ds(i * Bh, Bh), :] for i in range(n_sub))

    def step(t, hs):
        row = pl.multiple_of(t * Bc, Bc)
        new = []
        for i in range(n_sub):          # independent sub-tiles -> MXU/VPU/EUP overlap
            pre = xw_ref[pl.ds(row + i * Bh, Bh), :] + jnp.dot(
                hs[i].astype(mxu_dt), whh, preferred_element_type=jnp.float32)
            new.append(jnp.tanh(pre))
        return tuple(new)

    hs = lax.fori_loop(0, Tc, step, h0, unroll=unroll)

    for i in range(n_sub):
        h_ref[pl.ds(i * Bh, Bh), :] = hs[i]

    @pl.when(t_idx == n_t - 1)
    def _():
        h_out_ref[0] = h_ref[...].astype(h_out_ref.dtype)


# ----------------------------- wrapper ---------------------------------------


def _round_up(x, m):
    return ((x + m - 1) // m) * m


def _cdiv(a, b):
    return (a + b - 1) // b


def _pick_batch_chunk(B, max_chunk=256):
    """Sublane-aligned batch chunk; >=2 chunks when batch permits (v7x 2-TC)."""
    Bp8 = _round_up(max(B, 1), 8)
    if Bp8 <= 16:
        return Bp8                      # tiny batch: single chunk, no waste
    return min(max_chunk, _round_up(_cdiv(Bp8, 2), 8))


def _pick_time_chunk(T, Bc, D, mxu_bytes, max_time_chunk=None,
                     budget_bytes=16 << 20):
    """Largest divisor of T whose XW scratch + double-buffered x fits budget."""
    per_t = Bc * (128 * 4 + 2 * D * mxu_bytes)
    tmax = max(1, budget_bytes // per_t)
    if max_time_chunk is not None:
        tmax = min(tmax, max_time_chunk)
    for tc in range(min(T, tmax), 0, -1):
        if T % tc == 0:
            return tc
    return 1


def _vmem_limit_bytes(Tc, Bc, D, H, mxu_bytes):
    need = (Tc * Bc * H * 4            # xw scratch
            + Bc * H * 4               # h scratch
            + 2 * Tc * Bc * D * mxu_bytes   # double-buffered x block
            + (D * H + H * H) * mxu_bytes + H * 4   # weights + bias
            + 2 * Bc * H * 4)          # double-buffered output block
    return int(min(max(2 * need + (4 << 20), 16 << 20), 56 << 20))


def sign_language_model_pallas(x_btd, params, *, mxu_dtype=jnp.bfloat16,
                               batch_chunk=None, max_time_chunk=None):
    """x_btd: (B, T, D_in) float32 (batch-first, like PyTorch). Returns (B, O)."""
    w_ih, w_hh, b_ih, b_hh, w_fc, b_fc = (
        params["w_ih"], params["w_hh"], params["b_ih"],
        params["b_hh"], params["w_fc"], params["b_fc"])

    B, T, D = x_btd.shape
    H = w_ih.shape[0]

    mxu_bytes = jnp.dtype(mxu_dtype).itemsize
    Bc = batch_chunk if batch_chunk is not None else _pick_batch_chunk(B)
    Bc = _round_up(Bc, 8)
    nc = _cdiv(B, Bc)                   # independent chunks -> "parallel" axis
    Bp = nc * Bc
    n_sub = 2 if (Bc >= 16 and Bc % 16 == 0) else 1

    Tc = _pick_time_chunk(T, Bc, D, mxu_bytes, max_time_chunk)
    nt = T // Tc
    unroll = True if Tc <= 16 else 8    # bounded unroll for long sequences

    # Pad batch to whole chunks, go time-major inside each chunk, flatten so
    # each timestep's rows are a contiguous (Bc, D) slab.
    x_p = jnp.pad(x_btd, ((0, Bp - B), (0, 0), (0, 0)))            # (Bp, T, D)
    x_chunks = x_p.reshape(nc, Bc, T, D).transpose(0, 2, 1, 3)     # (nc, T, Bc, D)
    x_chunks = x_chunks.reshape(nc, T * Bc, D).astype(mxu_dtype)

    wih_t = w_ih.T.astype(mxu_dtype)                               # (D, H)
    whh_t = w_hh.T.astype(mxu_dtype)                               # (H, H)
    b_rnn = (b_ih + b_hh).reshape(1, H).astype(jnp.float32)        # folded bias

    kernel = functools.partial(_rnn_kernel, n_sub=n_sub, unroll=unroll)

    h_last = pl.pallas_call(
        kernel,
        out_shape=jax.ShapeDtypeStruct((nc, Bc, H), jnp.float32),
        grid_spec=pltpu.PrefetchScalarGridSpec(
            num_scalar_prefetch=0,
            grid=(nc, nt),
            in_specs=[
                pl.BlockSpec((1, Tc * Bc, D), lambda c, t: (c, t, 0)),  # x
                pl.BlockSpec((D, H), lambda c, t: (0, 0)),              # W_ih^T
                pl.BlockSpec((H, H), lambda c, t: (0, 0)),              # W_hh^T
                pl.BlockSpec((1, H), lambda c, t: (0, 0)),              # bias
            ],
            out_specs=pl.BlockSpec((1, Bc, H), lambda c, t: (c, 0, 0)),
            scratch_shapes=[
                pltpu.VMEM((Tc * Bc, H), jnp.float32),   # hoisted XW
                pltpu.VMEM((Bc, H), jnp.float32),        # h carry
            ],
        ),
        compiler_params=pltpu.CompilerParams(
            dimension_semantics=("parallel", "arbitrary"),
            vmem_limit_bytes=_vmem_limit_bytes(Tc, Bc, D, H, mxu_bytes)),
    )(x_chunks, wih_t, whh_t, b_rnn)

    # Tiny lane-sparse FC (H=128 -> O=5) runs in plain JAX on the lane-dense
    # kernel output (keeps the in-kernel stores unmasked / full-lane).
    h_flat = h_last.reshape(Bp, H)[:B]
    return h_flat @ w_fc.T + b_fc


# ----------------------------- reference -------------------------------------


def sign_language_model_ref(x_btd, params):
    """Pure-JAX reference matching nn.RNN(batch_first=True) + Linear."""
    w_ih, w_hh, b_ih, b_hh, w_fc, b_fc = (
        params["w_ih"], params["w_hh"], params["b_ih"],
        params["b_hh"], params["w_fc"], params["b_fc"])
    B = x_btd.shape[0]
    H = w_ih.shape[0]
    h0 = jnp.zeros((B, H), jnp.float32)

    def step(h, x_t):
        h_new = jnp.tanh(x_t @ w_ih.T + b_ih + h @ w_hh.T + b_hh)
        return h_new, None

    x_tbd = jnp.transpose(x_btd, (1, 0, 2))
    h_last, _ = lax.scan(step, h0, x_tbd)
    return h_last @ w_fc.T + b_fc


def init_params(key, input_size=11, hidden_size=128, output_size=5):
    ks = jax.random.split(key, 6)
    scale = 1.0 / jnp.sqrt(hidden_size)
    u = lambda k, shape: jax.random.uniform(k, shape, jnp.float32, -scale, scale)
    return {
        "w_ih": u(ks[0], (hidden_size, input_size)),
        "w_hh": u(ks[1], (hidden_size, hidden_size)),
        "b_ih": u(ks[2], (hidden_size,)),
        "b_hh": u(ks[3], (hidden_size,)),
        "w_fc": u(ks[4], (output_size, hidden_size)),
        "b_fc": u(ks[5], (output_size,)),
    }


if __name__ == "__main__":
    key = jax.random.PRNGKey(0)
    k_x, k_x2, k_p = jax.random.split(key, 3)

    B, T, D_IN, H, O = 2, 8, 11, 128, 5
    params = init_params(k_p, input_size=D_IN, hidden_size=H, output_size=O)

    # --- small case (single batch-chunk, single time-chunk) -----------------
    x = jax.random.normal(k_x, (B, T, D_IN), jnp.float32)
    ref = jax.block_until_ready(sign_language_model_ref(x, params))

    out_f32 = jax.block_until_ready(
        sign_language_model_pallas(x, params, mxu_dtype=jnp.float32))
    assert out_f32.shape == (B, O)
    assert jnp.allclose(out_f32, ref, atol=1e-4, rtol=1e-4), (out_f32, ref)

    out_bf16 = jax.block_until_ready(
        sign_language_model_pallas(x, params))      # bf16 MXU default
    assert out_bf16.shape == (B, O)
    assert jnp.allclose(out_bf16, ref, atol=3e-2, rtol=3e-2), (out_bf16, ref)

    # --- larger case exercising multi-chunk batch, sub-tile interleave and
    #     time-chunked h-carry across grid iterations ------------------------
    B2, T2 = 20, 12
    x2 = jax.random.normal(k_x2, (B2, T2, D_IN), jnp.float32)
    ref2 = jax.block_until_ready(sign_language_model_ref(x2, params))

    out2 = jax.block_until_ready(
        sign_language_model_pallas(x2, params, mxu_dtype=jnp.float32,
                                   max_time_chunk=4))
    assert out2.shape == (B2, O)
    assert jnp.allclose(out2, ref2, atol=1e-4, rtol=1e-4), (out2, ref2)

    print("KERNEL_OK")
</pallas_src>

<mosaic_0001>
module attributes {stable_mosaic.version = 11 : i64} {
  func.func @_rnn_kernel(%arg0: i32, %arg1: i32, %arg2: memref<1x64x11xf32, #tpu.memory_space<vmem>>, %arg3: memref<11x128xf32, #tpu.memory_space<vmem>>, %arg4: memref<128x128xf32, #tpu.memory_space<vmem>>, %arg5: memref<1x128xf32, #tpu.memory_space<vmem>>, %arg6: memref<1x8x128xf32, #tpu.memory_space<vmem>>, %arg7: memref<64x128xf32, #tpu.memory_space<vmem>>, %arg8: memref<8x128xf32, #tpu.memory_space<vmem>>) attributes {dimension_semantics = [#tpu.dimension_semantics<parallel>, #tpu.dimension_semantics<arbitrary>], iteration_bounds = array<i64: 1, 1>, scalar_prefetch = 0 : i64, scratch_operands = 2 : i64, tpu.core_type = #tpu.core_type<tc>, window_params = [{transform_indices = @transform_0, window_bounds = array<i64: 1, 64, 11>}, {pipeline_mode = #tpu.pipeline_mode<synchronous>, transform_indices = @transform_1, window_bounds = array<i64: 11, 128>}, {pipeline_mode = #tpu.pipeline_mode<synchronous>, transform_indices = @transform_2, window_bounds = array<i64: 128, 128>}, {pipeline_mode = #tpu.pipeline_mode<synchronous>, transform_indices = @transform_3, window_bounds = array<i64: 1, 128>}, {transform_indices = @transform_4, window_bounds = array<i64: 1, 8, 128>}]} {
    %c0_i32 = arith.constant 0 : i32
    %0 = arith.cmpi eq, %arg1, %c0_i32 : i32
    %1 = arith.extui %0 : i1 to i32
    %c0_i32_0 = arith.constant 0 : i32
    %2 = arith.cmpi ne, %1, %c0_i32_0 : i32
    scf.if %2 {
      %cst_50 = arith.constant 0.000000e+00 : f32
      %81 = vector.broadcast %cst_50 : f32 to vector<8x128xf32>
      %c0_51 = arith.constant 0 : index
      %c0_52 = arith.constant 0 : index
      %82 = vector.load %arg8[%c0_51, %c0_52] : memref<8x128xf32, #tpu.memory_space<vmem>>, vector<8x128xf32>
      tpu.vector_store %arg8[%c0_51, %c0_52], %81 {strides = array<i32>} : memref<8x128xf32, #tpu.memory_space<vmem>>, vector<8x128xf32>,
    } else {
    }
    %c0 = arith.constant 0 : index
    %c0_1 = arith.constant 0 : index
    %c0_2 = arith.constant 0 : index
    %3 = vector.load %arg2[%c0, %c0_1, %c0_2] : memref<1x64x11xf32, #tpu.memory_space<vmem>>, vector<1x64x11xf32>
    %4 = vector.shape_cast %3 : vector<1x64x11xf32> to vector<64x11xf32>
    %c0_3 = arith.constant 0 : index
    %c0_4 = arith.constant 0 : index
    %5 = vector.load %arg3[%c0_3, %c0_4] : memref<11x128xf32, #tpu.memory_space<vmem>>, vector<11x128xf32>
    %cst = arith.constant dense<0.000000e+00> : vector<64x128xf32>
    %6 = tpu.matmul %4, %5, %cst {dimension_numbers = #tpu.dot_dimension_numbers<[1], [0], [0], [1], [0, 0, 1, 1], [], []>} : vector<64x11xf32>, vector<11x128xf32>, vector<64x128xf32> -> vector<64x128xf32>
    %c0_5 = arith.constant 0 : index
    %c0_6 = arith.constant 0 : index
    %7 = vector.load %arg5[%c0_5, %c0_6] : memref<1x128xf32, #tpu.memory_space<vmem>>, vector<1x128xf32>
    %8 = vector.broadcast %7 : vector<1x128xf32> to vector<64x128xf32>
    %9 = arith.addf %6, %8 : vector<64x128xf32>
    %c0_7 = arith.constant 0 : index
    %c0_8 = arith.constant 0 : index
    %10 = vector.load %arg7[%c0_7, %c0_8] : memref<64x128xf32, #tpu.memory_space<vmem>>, vector<64x128xf32>
    tpu.vector_store %arg7[%c0_7, %c0_8], %9 {strides = array<i32>} : memref<64x128xf32, #tpu.memory_space<vmem>>, vector<64x128xf32>,
    %c0_9 = arith.constant 0 : index
    %c0_10 = arith.constant 0 : index
    %11 = vector.load %arg4[%c0_9, %c0_10] : memref<128x128xf32, #tpu.memory_space<vmem>>, vector<128x128xf32>
    %c0_11 = arith.constant 0 : index
    %c0_12 = arith.constant 0 : index
    %12 = vector.load %arg8[%c0_11, %c0_12] : memref<8x128xf32, #tpu.memory_space<vmem>>, vector<8x128xf32>
    %c0_i32_13 = arith.constant 0 : i32
    %c8_i32 = arith.constant 8 : i32
    %13 = arith.muli %c0_i32_13, %c8_i32 : i32
    %14 = tpu.assume_multiple %13, 8 : i32
    %c0_i32_14 = arith.constant 0 : i32
    %15 = arith.addi %14, %c0_i32_14 : i32
    %16 = arith.index_cast %15 : i32 to index
    %c0_15 = arith.constant 0 : index
    %17 = vector.load %arg7[%16, %c0_15] : memref<64x128xf32, #tpu.memory_space<vmem>>, vector<8x128xf32>
    %cst_16 = arith.constant dense<0.000000e+00> : vector<8x128xf32>
    %18 = tpu.matmul %12, %11, %cst_16 {dimension_numbers = #tpu.dot_dimension_numbers<[1], [0], [0], [1], [0, 0, 1, 1], [], []>} : vector<8x128xf32>, vector<128x128xf32>, vector<8x128xf32> -> vector<8x128xf32>
    %19 = arith.addf %17, %18 : vector<8x128xf32>
    %20 = math.tanh %19 : vector<8x128xf32>
    %c1_i32 = arith.constant 1 : i32
    %c8_i32_17 = arith.constant 8 : i32
    %21 = arith.muli %c1_i32, %c8_i32_17 : i32
    %22 = tpu.assume_multiple %21, 8 : i32
    %c0_i32_18 = arith.constant 0 : i32
    %23 = arith.addi %22, %c0_i32_18 : i32
    %24 = arith.index_cast %23 : i32 to index
    %c0_19 = arith.constant 0 : index
    %25 = vector.load %arg7[%24, %c0_19] : memref<64x128xf32, #tpu.memory_space<vmem>>, vector<8x128xf32>
    %cst_20 = arith.constant dense<0.000000e+00> : vector<8x128xf32>
    %26 = tpu.matmul %20, %11, %cst_20 {dimension_numbers = #tpu.dot_dimension_numbers<[1], [0], [0], [1], [0, 0, 1, 1], [], []>} : vector<8x128xf32>, vector<128x128xf32>, vector<8x128xf32> -> vector<8x128xf32>
    %27 = arith.addf %25, %26 : vector<8x128xf32>
    %28 = math.tanh %27 : vector<8x128xf32>
    %c2_i32 = arith.constant 2 : i32
    %c8_i32_21 = arith.constant 8 : i32
    %29 = arith.muli %c2_i32, %c8_i32_21 : i32
    %30 = tpu.assume_multiple %29, 8 : i32
    %c0_i32_22 = arith.constant 0 : i32
    %31 = arith.addi %30, %c0_i32_22 : i32
    %32 = arith.index_cast %31 : i32 to index
    %c0_23 = arith.constant 0 : index
    %33 = vector.load %arg7[%32, %c0_23] : memref<64x128xf32, #tpu.memory_space<vmem>>, vector<8x128xf32>
    %cst_24 = arith.constant dense<0.000000e+00> : vector<8x128xf32>
    %34 = tpu.matmul %28, %11, %cst_24 {dimension_numbers = #tpu.dot_dimension_numbers<[1], [0], [0], [1], [0, 0, 1, 1], [], []>} : vector<8x128xf32>, vector<128x128xf32>, vector<8x128xf32> -> vector<8x128xf32>
    %35 = arith.addf %33, %34 : vector<8x128xf32>
    %36 = math.tanh %35 : vector<8x128xf32>
    %c3_i32 = arith.constant 3 : i32
    %c8_i32_25 = arith.constant 8 : i32
    %37 = arith.muli %c3_i32, %c8_i32_25 : i32
    %38 = tpu.assume_multiple %37, 8 : i32
    %c0_i32_26 = arith.constant 0 : i32
    %39 = arith.addi %38, %c0_i32_26 : i32
    %40 = arith.index_cast %39 : i32 to index
    %c0_27 = arith.constant 0 : index
    %41 = vector.load %arg7[%40, %c0_27] : memref<64x128xf32, #tpu.memory_space<vmem>>, vector<8x128xf32>
    %cst_28 = arith.constant dense<0.000000e+00> : vector<8x128xf32>
    %42 = tpu.matmul %36, %11, %cst_28 {dimension_numbers = #tpu.dot_dimension_numbers<[1], [0], [0], [1], [0, 0, 1, 1], [], []>} : vector<8x128xf32>, vector<128x128xf32>, vector<8x128xf32> -> vector<8x128xf32>
    %43 = arith.addf %41, %42 : vector<8x128xf32>
    %44 = math.tanh %43 : vector<8x128xf32>
    %c4_i32 = arith.constant 4 : i32
    %c8_i32_29 = arith.constant 8 : i32
    %45 = arith.muli %c4_i32, %c8_i32_29 : i32
    %46 = tpu.assume_multiple %45, 8 : i32
    %c0_i32_30 = arith.constant 0 : i32
    %47 = arith.addi %46, %c0_i32_30 : i32
    %48 = arith.index_cast %47 : i32 to index
    %c0_31 = arith.constant 0 : index
    %49 = vector.load %arg7[%48, %c0_31] : memref<64x128xf32, #tpu.memory_space<vmem>>, vector<8x128xf32>
    %cst_32 = arith.constant dense<0.000000e+00> : vector<8x128xf32>
    %50 = tpu.matmul %44, %11, %cst_32 {dimension_numbers = #tpu.dot_dimension_numbers<[1], [0], [0], [1], [0, 0, 1, 1], [], []>} : vector<8x128xf32>, vector<128x128xf32>, vector<8x128xf32> -> vector<8x128xf32>
    %51 = arith.addf %49, %50 : vector<8x128xf32>
    %52 = math.tanh %51 : vector<8x128xf32>
    %c5_i32 = arith.constant 5 : i32
    %c8_i32_33 = arith.constant 8 : i32
    %53 = arith.muli %c5_i32, %c8_i32_33 : i32
    %54 = tpu.assume_multiple %53, 8 : i32
    %c0_i32_34 = arith.constant 0 : i32
    %55 = arith.addi %54, %c0_i32_34 : i32
    %56 = arith.index_cast %55 : i32 to index
    %c0_35 = arith.constant 0 : index
    %57 = vector.load %arg7[%56, %c0_35] : memref<64x128xf32, #tpu.memory_space<vmem>>, vector<8x128xf32>
    %cst_36 = arith.constant dense<0.000000e+00> : vector<8x128xf32>
    %58 = tpu.matmul %52, %11, %cst_36 {dimension_numbers = #tpu.dot_dimension_numbers<[1], [0], [0], [1], [0, 0, 1, 1], [], []>} : vector<8x128xf32>, vector<128x128xf32>, vector<8x128xf32> -> vector<8x128xf32>
    %59 = arith.addf %57, %58 : vector<8x128xf32>
    %60 = math.tanh %59 : vector<8x128xf32>
    %c6_i32 = arith.constant 6 : i32
    %c8_i32_37 = arith.constant 8 : i32
    %61 = arith.muli %c6_i32, %c8_i32_37 : i32
    %62 = tpu.assume_multiple %61, 8 : i32
    %c0_i32_38 = arith.constant 0 : i32
    %63 = arith.addi %62, %c0_i32_38 : i32
    %64 = arith.index_cast %63 : i32 to index
    %c0_39 = arith.constant 0 : index
    %65 = vector.load %arg7[%64, %c0_39] : memref<64x128xf32, #tpu.memory_space<vmem>>, vector<8x128xf32>
    %cst_40 = arith.constant dense<0.000000e+00> : vector<8x128xf32>
    %66 = tpu.matmul %60, %11, %cst_40 {dimension_numbers = #tpu.dot_dimension_numbers<[1], [0], [0], [1], [0, 0, 1, 1], [], []>} : vector<8x128xf32>, vector<128x128xf32>, vector<8x128xf32> -> vector<8x128xf32>
    %67 = arith.addf %65, %66 : vector<8x128xf32>
    %68 = math.tanh %67 : vector<8x128xf32>
    %c7_i32 = arith.constant 7 : i32
    %c8_i32_41 = arith.constant 8 : i32
    %69 = arith.muli %c7_i32, %c8_i32_41 : i32
    %70 = tpu.assume_multiple %69, 8 : i32
    %c0_i32_42 = arith.constant 0 : i32
    %71 = arith.addi %70, %c0_i32_42 : i32
    %72 = arith.index_cast %71 : i32 to index
    %c0_43 = arith.constant 0 : index
    %73 = vector.load %arg7[%72, %c0_43] : memref<64x128xf32, #tpu.memory_space<vmem>>, vector<8x128xf32>
    %cst_44 = arith.constant dense<0.000000e+00> : vector<8x128xf32>
    %74 = tpu.matmul %68, %11, %cst_44 {dimension_numbers = #tpu.dot_dimension_numbers<[1], [0], [0], [1], [0, 0, 1, 1], [], []>} : vector<8x128xf32>, vector<128x128xf32>, vector<8x128xf32> -> vector<8x128xf32>
    %75 = arith.addf %73, %74 : vector<8x128xf32>
    %76 = math.tanh %75 : vector<8x128xf32>
    %c8_i32_45 = arith.constant 8 : i32
    %c0_46 = arith.constant 0 : index
    %c0_47 = arith.constant 0 : index
    %77 = vector.load %arg8[%c0_46, %c0_47] : memref<8x128xf32, #tpu.memory_space<vmem>>, vector<8x128xf32>
    tpu.vector_store %arg8[%c0_46, %c0_47], %76 {strides = array<i32>} : memref<8x128xf32, #tpu.memory_space<vmem>>, vector<8x128xf32>,
    %c0_i32_48 = arith.constant 0 : i32
    %78 = arith.cmpi eq, %arg1, %c0_i32_48 : i32
    %79 = arith.extui %78 : i1 to i32
    %c0_i32_49 = arith.constant 0 : i32
    %80 = arith.cmpi ne, %79, %c0_i32_49 : i32
    scf.if %80 {
      %c0_50 = arith.constant 0 : index
      %c0_51 = arith.constant 0 : index
      %81 = vector.load %arg8[%c0_50, %c0_51] : memref<8x128xf32, #tpu.memory_space<vmem>>, vector<8x128xf32>
      %c0_52 = arith.constant 0 : index
      %c0_53 = arith.constant 0 : index
      %c0_54 = arith.constant 0 : index
      %82 = vector.load %arg6[%c0_52, %c0_53, %c0_54] : memref<1x8x128xf32, #tpu.memory_space<vmem>>, vector<1x8x128xf32>
      %83 = vector.shape_cast %82 : vector<1x8x128xf32> to vector<8x128xf32>
      %84 = vector.shape_cast %81 : vector<8x128xf32> to vector<1x8x128xf32>
      tpu.vector_store %arg6[%c0_52, %c0_53, %c0_54], %84 {strides = array<i32>} : memref<1x8x128xf32, #tpu.memory_space<vmem>>, vector<1x8x128xf32>,
    } else {
    }
    return
  }
  func.func @transform_0(%arg0: i32, %arg1: i32) -> (i32, i32, i32) {
    %c0_i32 = arith.constant 0 : i32
    %c0_i32_0 = arith.constant 0 : i32
    return %arg0, %arg1, %c0_i32 : i32, i32, i32
  }
  func.func @transform_1(%arg0: i32, %arg1: i32) -> (i32, i32) {
    %c0_i32 = arith.constant 0 : i32
    %c0_i32_0 = arith.constant 0 : i32
    %c0_i32_1 = arith.constant 0 : i32
    return %c0_i32, %c0_i32_0 : i32, i32
  }
  func.func @transform_2(%arg0: i32, %arg1: i32) -> (i32, i32) {
    %c0_i32 = arith.constant 0 : i32
    %c0_i32_0 = arith.constant 0 : i32
    %c0_i32_1 = arith.constant 0 : i32
    return %c0_i32, %c0_i32_0 : i32, i32
  }
  func.func @transform_3(%arg0: i32, %arg1: i32) -> (i32, i32) {
    %c0_i32 = arith.constant 0 : i32
    %c0_i32_0 = arith.constant 0 : i32
    %c0_i32_1 = arith.constant 0 : i32
    return %c0_i32, %c0_i32_0 : i32, i32
  }
  func.func @transform_4(%arg0: i32, %arg1: i32) -> (i32, i32, i32) {
    %c0_i32 = arith.constant 0 : i32
    %c0_i32_0 = arith.constant 0 : i32
    %c0_i32_1 = arith.constant 0 : i32
    return %arg0, %c0_i32, %c0_i32_0 : i32, i32, i32
  }
}

</mosaic_0001>

<llo_original>
// kernel: tpu_custom_call.1
$region0: #{tpu_custom_call.1}
  #allocation0 [shape = 'u32[]', space=smem, size = 0x4, offset = 0x4, fixed_abs, tag = 'smem constant byte address 0x4 - core index']
  #allocation1 [shape = 'u32[144,128]{1,0:T(1,128)}', space=vmem, size = 0x12000, scoped, tag = 'internal scratch']
  #allocation2 [shape = 'f32[64,128]{1,0:T(8,128)}', space=vmem, size = 0x8000, scoped, tag = 'scratch operand']
  #allocation3 [shape = 'f32[8,128]{1,0:T(8,128)}', space=vmem, size = 0x1000, scoped, tag = 'scratch operand']
  %s0 = inlined_call_operand.vmem [shape: f32[1,64,11], index: 0, kind: input, shape index: {}]
  %s1 = inlined_call_operand.vmem [shape: f32[11,128], index: 1, kind: input, shape index: {}]
  %s2 = inlined_call_operand.hbm [shape: f32[128,128], index: 2, kind: input, shape index: {}]
  %s3 = inlined_call_operand.vmem [shape: f32[1,128], index: 3, kind: input, shape index: {}]
  %s4 = inlined_call_operand.hbm [shape: f32[1,8,128], index: 4, kind: output, shape index: {}]
  %s5 = sld [smem:[#allocation0]]
  $region38: #{tpu_custom_call.1} parent=0
    _
  %s7 = ssub.s32 1, %s5
  %s8 = scalar_select 0, %s7, %s5
  $region1: #{tpu_custom_call.1} parent=0
    #allocation4 [shape = 'u8[65536]{0}', space=vmem, size = 0x10000, scoped, tag = 'input window, operand 2, single buffered']
    #allocation5 [shape = 's32[1]{0}', space=sflag, size = 0x4, scoped, tag = 'scoped memory for tpu_custom_call.1']
    #allocation6 [shape = 's32[1]{0}', space=sflag, size = 0x4, scoped, tag = 'scoped memory for tpu_custom_call.1']
    #allocation7 [shape = 'u8[4096]{0}', space=vmem, size = 0x1000, scoped, tag = 'output window, operand 0, single buffered']
    %9 = vsyncpa [#allocation5], 0
    %10 = vsyncpa [#allocation6], 0
    // Predicated region
    $region2: #{tpu_custom_call.1} parent=1 // pred_check
      _
    $region3: #{tpu_custom_call.1} parent=1 // pred_check_branch
      %12 = sbr.rel (0) target = $region5
    $region4: #{tpu_custom_call.1} parent=1 // pred_region
      _
    $region5: #{tpu_custom_call.1} parent=1 // pred_fallthru
      _
    // Predicated region
    $region6: #{tpu_custom_call.1} parent=1 // pred_check
      _
    $region7: #{tpu_custom_call.1} parent=1 // pred_check_branch
      %14 = sbr.rel (0) target = $region9
    $region8: #{tpu_custom_call.1} parent=1 // pred_region
      _
    $region9: #{tpu_custom_call.1} parent=1 // pred_fallthru
      _
    // Predicated region
    $region10: #{tpu_custom_call.1} parent=1 // pred_check
      _
    $region11: #{tpu_custom_call.1} parent=1 // pred_check_branch
      %16 = sbr.rel (0) target = $region13
    $region12: #{tpu_custom_call.1} parent=1 // pred_region
      %s18 = ssub.s32 2048, 2048
      %19 = vsyncadd [#allocation5], %s18
      %s20 = sshll.u32 [#allocation4], 4
      %s21 = int_to_ptr.vmem [resolvable:$true] %s20
      %26 = dma.hbm_to_vmem [thread:$0]  %s2, 2048, %s21, [#allocation5], 128, 128, 8
    $region13: #{tpu_custom_call.1} parent=1 // pred_fallthru
      _
    // Predicated region
    $region14: #{tpu_custom_call.1} parent=1 // pred_check
      _
    $region15: #{tpu_custom_call.1} parent=1 // pred_check_branch
      %28 = sbr.rel (0) target = $region17
    $region16: #{tpu_custom_call.1} parent=1 // pred_region
      _
    $region17: #{tpu_custom_call.1} parent=1 // pred_fallthru
      _
    // Predicated region
    $region18: #{tpu_custom_call.1} parent=1 // pred_check
      _
    $region19: #{tpu_custom_call.1} parent=1 // pred_check_branch
      %30 = sbr.rel (0) target = $region21
    $region20: #{tpu_custom_call.1} parent=1 // pred_region
      %31 = dma.done [#allocation5], 2048
    $region21: #{tpu_custom_call.1} parent=1 // pred_fallthru
      _
    %p32 = scmp.eq.s32.totalorder 0, 0
    // Predicated region
    $region22: #{tpu_custom_call.1} parent=1 // pred_check
      %p33 = pneg %p32
    $region23: #{tpu_custom_call.1} parent=1 // pred_check_branch
      %35 = sbr.rel (%p33) target = $region25
    $region24: #{tpu_custom_call.1} parent=1 // pred_region
      %36 = vst [vmem:[#allocation3] sm:$0xff] 0.0
    $region25: #{tpu_custom_call.1} parent=1 // pred_fallthru
      _
    %v37 = vld [vmem:[%s0] sm:$0xff]
    %v38 = vld [vmem:[%s0 + $0x8] sm:$0xff]
    %v39 = vld [vmem:[%s0 + $0x10] sm:$0xff]
    %v40 = vld [vmem:[%s0 + $0x18] sm:$0xff]
    %v41 = vld [vmem:[%s0 + $0x20] sm:$0xff]
    %v42 = vld [vmem:[%s0 + $0x28] sm:$0xff]
    %v43 = vld [vmem:[%s0 + $0x30] sm:$0xff]
    %v44 = vld [vmem:[%s0 + $0x38] sm:$0xff]
    %v45 = vld [vmem:[%s1] sm:$0xff]
    %v46 = vld [vmem:[%s1 + $0x8] sm:$0x7]
    %v47 = vld [vmem:[%s3] sm:$0x1]
    %v49 = vlaneseq
    %v50 = vshrl.u32 %v49, 7
    %v51 = vsub.s32 0, %v50
    %v52 = vrot.slane %v47, %v51
    %vm54 = vcmask 89088
    %v56 = vsel %vm54, %v37, 0
    %v59 = vsel %vm54, %v38, 0
    %v62 = vsel %vm54, %v39, 0
    %v65 = vsel %vm54, %v40, 0
    %v68 = vsel %vm54, %v41, 0
    %v71 = vsel %vm54, %v42, 0
    %v74 = vsel %vm54, %v43, 0
    %v77 = vsel %vm54, %v44, 0
    %vm79 = vcmask 1042432
    %v81 = vsel %vm79, %v46, 0
    %83 = vmatprep.subr.mxu0 0.0
    %84 = vmatpush1.msra.mxu0 %v45
    %85 = vmatprep.subr.mxu0 0.0
    %86 = vmatpush1.msra.mxu0 %v81
    %87 = vmatprep.subr.mxu0 0.0
    %88 = vmatpush1.msra.mxu0 0.0
    %89 = vmatprep.subr.mxu0 0.0
    %90 = vmatpush1.msra.mxu0 0.0
    %91 = vmatprep.subr.mxu0 0.0
    %92 = vmatpush1.msra.mxu0 0.0
    %93 = vmatprep.subr.mxu0 0.0
    %94 = vmatpush1.msra.mxu0 0.0
    %95 = vmatprep.subr.mxu0 0.0
    %96 = vmatpush1.msra.mxu0 0.0
    %97 = vmatprep.subr.mxu0 0.0
    %98 = vmatpush1.msra.mxu0 0.0
    %99 = vmatprep.subr.mxu0 0.0
    %100 = vmatpush1.msra.mxu0 0.0
    %101 = vmatprep.subr.mxu0 0.0
    %102 = vmatpush1.msra.mxu0 0.0
    %103 = vmatprep.subr.mxu0 0.0
    %104 = vmatpush1.msra.mxu0 0.0
    %105 = vmatprep.subr.mxu0 0.0
    %106 = vmatpush1.msra.mxu0 0.0
    %107 = vmatprep.subr.mxu0 0.0
    %108 = vmatpush1.msra.mxu0 0.0
    %109 = vmatprep.subr.mxu0 0.0
    %110 = vmatpush1.msra.mxu0 0.0
    %111 = vmatprep.subr.mxu0 0.0
    %112 = vmatpush1.msra.mxu0 0.0
    %113 = vmatprep.subr.mxu0 0.0
    %114 = vmatpush1.msra.mxu0 0.0
    %115 = vmatprep.subr.mxu0 0.0
    %116 = vmatpush1.msra.mxu0 0.0
    %117 = vmatprep.subr.mxu0 0.0
    %118 = vmatpush1.msra.mxu0 0.0
    %119 = vmatprep.subr.mxu0 0.0
    %120 = vmatpush1.msra.mxu0 0.0
    %121 = vmatprep.subr.mxu0 0.0
    %122 = vmatpush1.msra.mxu0 0.0
    %123 = vmatprep.subr.mxu0 0.0
    %124 = vmatpush1.msra.mxu0 0.0
    %125 = vmatprep.subr.mxu0 0.0
    %126 = vmatpush1.msra.mxu0 0.0
    %127 = vmatprep.subr.mxu0 0.0
    %128 = vmatpush1.msra.mxu0 0.0
    %129 = vmatprep.subr.mxu0 0.0
    %130 = vmatpush1.msra.mxu0 0.0
    %131 = vmatprep.subr.mxu0 0.0
    %132 = vmatpush1.msra.mxu0 0.0
    %133 = vmatprep.subr.mxu0 0.0
    %134 = vmatpush1.msra.mxu0 0.0
    %135 = vmatprep.subr.mxu0 0.0
    %136 = vmatpush1.msra.mxu0 0.0
    %137 = vmatprep.subr.mxu0 0.0
    %138 = vmatpush1.msra.mxu0 0.0
    %139 = vmatprep.subr.mxu0 0.0
    %140 = vmatpush1.msra.mxu0 0.0
    %141 = vmatprep.subr.mxu0 0.0
    %142 = vmatpush1.msra.mxu0 0.0
    %143 = vmatprep.subr.mxu0 0.0
    %144 = vmatpush1.msra.mxu0 0.0
    %145 = vmatprep.subr.mxu0 0.0
    %146 = vmatpush1.msra.mxu0 0.0
    %147 = vmatprep.mubr.f32.mxu0 0.0
    %148 = vmatmul.mubr.f32.gmra.mrb[0].mxu0 %v56
    %v149 = vpop.f32.mrb[0].mxu0
    %v150 = vadd.f32 %v52, %v149
    %v151 = vpop.f32.mrb[0].mxu0
    %152 = vmatprep.mubr.f32.mxu0 0.0
    %153 = vmatmul.mubr.f32.gmra.mrb[0].mxu0 %v59
    %v154 = vpop.f32.mrb[0].mxu0
    %v155 = vadd.f32 %v52, %v154
    %v156 = vpop.f32.mrb[0].mxu0
    %157 = vmatprep.mubr.f32.mxu0 0.0
    %158 = vmatmul.mubr.f32.gmra.mrb[0].mxu0 %v62
    %v159 = vpop.f32.mrb[0].mxu0
    %v160 = vadd.f32 %v52, %v159
    %v161 = vpop.f32.mrb[0].mxu0
    %162 = vmatprep.mubr.f32.mxu0 0.0
    %163 = vmatmul.mubr.f32.gmra.mrb[0].mxu0 %v65
    %v164 = vpop.f32.mrb[0].mxu0
    %v165 = vadd.f32 %v52, %v164
    %v166 = vpop.f32.mrb[0].mxu0
    %167 = vmatprep.mubr.f32.mxu0 0.0
    %168 = vmatmul.mubr.f32.gmra.mrb[0].mxu0 %v68
    %v169 = vpop.f32.mrb[0].mxu0
    %v170 = vadd.f32 %v52, %v169
    %v171 = vpop.f32.mrb[0].mxu0
    %172 = vmatprep.mubr.f32.mxu0 0.0
    %173 = vmatmul.mubr.f32.gmra.mrb[0].mxu0 %v71
    %v174 = vpop.f32.mrb[0].mxu0
    %v175 = vadd.f32 %v52, %v174
    %v176 = vpop.f32.mrb[0].mxu0
    %177 = vmatprep.mubr.f32.mxu0 0.0
    %178 = vmatmul.mubr.f32.gmra.mrb[0].mxu0 %v74
    %v179 = vpop.f32.mrb[0].mxu0
    %v180 = vadd.f32 %v52, %v179
    %v181 = vpop.f32.mrb[0].mxu0
    %182 = vmatprep.mubr.f32.mxu0 0.0
    %183 = vmatmul.mubr.f32.gmra.mrb[0].mxu0 %v77
    %v184 = vpop.f32.mrb[0].mxu0
    %v185 = vadd.f32 %v52, %v184
    %v186 = vpop.f32.mrb[0].mxu0
    %187 = vdwg.mxu0
    %188 = vst [vmem:[#allocation2] sm:$0xff] %v150
    %189 = vst [vmem:[#allocation2 + $0x8] sm:$0xff] %v155
    %190 = vst [vmem:[#allocation2 + $0x10] sm:$0xff] %v160
    %191 = vst [vmem:[#allocation2 + $0x18] sm:$0xff] %v165
    %192 = vst [vmem:[#allocation2 + $0x20] sm:$0xff] %v170
    %193 = vst [vmem:[#allocation2 + $0x28] sm:$0xff] %v175
    %194 = vst [vmem:[#allocation2 + $0x30] sm:$0xff] %v180
    %195 = vst [vmem:[#allocation2 + $0x38] sm:$0xff] %v185
    %v196 = vld [vmem:[#allocation4] sm:$0xff]
    %v197 = vld [vmem:[#allocation4 + $0x8] sm:$0xff]
    %v198 = vld [vmem:[#allocation4 + $0x10] sm:$0xff]
    %v199 = vld [vmem:[#allocation4 + $0x18] sm:$0xff]
    %v200 = vld [vmem:[#allocation4 + $0x20] sm:$0xff]
    %v201 = vld [vmem:[#allocation4 + $0x28] sm:$0xff]
    %v202 = vld [vmem:[#allocation4 + $0x30] sm:$0xff]
    %v203 = vld [vmem:[#allocation4 + $0x38] sm:$0xff]
    %v204 = vld [vmem:[#allocation4 + $0x40] sm:$0xff]
    %v205 = vld [vmem:[#allocation4 + $0x48] sm:$0xff]
    %v206 = vld [vmem:[#allocation4 + $0x50] sm:$0xff]
    %v207 = vld [vmem:[#allocation4 + $0x58] sm:$0xff]
    %v208 = vld [vmem:[#allocation4 + $0x60] sm:$0xff]
    %v209 = vld [vmem:[#allocation4 + $0x68] sm:$0xff]
    %v210 = vld [vmem:[#allocation4 + $0x70] sm:$0xff]
    %v211 = vld [vmem:[#allocation4 + $0x78] sm:$0xff]
    %v212 = vld [vmem:[#allocation3] sm:$0xff]
    %v213 = vld [vmem:[#allocation2] sm:$0xff]
    %214 = vmatprep.subr.mxu0 0.0
    %215 = vmatpush1.msra.mxu0 %v196
    %216 = vmatprep.subr.mxu0 0.0
    %217 = vmatpush1.msra.mxu0 %v197
    %218 = vmatprep.subr.mxu0 0.0
    %219 = vmatpush1.msra.mxu0 %v198
    %220 = vmatprep.subr.mxu0 0.0
    %221 = vmatpush1.msra.mxu0 %v199
    %222 = vmatprep.subr.mxu0 0.0
    %223 = vmatpush1.msra.mxu0 %v200
    %224 = vmatprep.subr.mxu0 0.0
    %225 = vmatpush1.msra.mxu0 %v201
    %226 = vmatprep.subr.mxu0 0.0
    %227 = vmatpush1.msra.mxu0 %v202
    %228 = vmatprep.subr.mxu0 0.0
    %229 = vmatpush1.msra.mxu0 %v203
    %230 = vmatprep.subr.mxu0 0.0
    %231 = vmatpush1.msra.mxu0 %v204
    %232 = vmatprep.subr.mxu0 0.0
    %233 = vmatpush1.msra.mxu0 %v205
    %234 = vmatprep.subr.mxu0 0.0
    %235 = vmatpush1.msra.mxu0 %v206
    %236 = vmatprep.subr.mxu0 0.0
    %237 = vmatpush1.msra.mxu0 %v207
    %238 = vmatprep.subr.mxu0 0.0
    %239 = vmatpush1.msra.mxu0 %v208
    %240 = vmatprep.subr.mxu0 0.0
    %241 = vmatpush1.msra.mxu0 %v209
    %242 = vmatprep.subr.mxu0 0.0
    %243 = vmatpush1.msra.mxu0 %v210
    %244 = vmatprep.subr.mxu0 0.0
    %245 = vmatpush1.msra.mxu0 %v211
    %246 = vmatprep.subr.mxu0 0.0
    %247 = vmatpush1.msra.mxu0 0.0
    %248 = vmatprep.subr.mxu0 0.0
    %249 = vmatpush1.msra.mxu0 0.0
    %250 = vmatprep.subr.mxu0 0.0
    %251 = vmatpush1.msra.mxu0 0.0
    %252 = vmatprep.subr.mxu0 0.0
    %253 = vmatpush1.msra.mxu0 0.0
    %254 = vmatprep.subr.mxu0 0.0
    %255 = vmatpush1.msra.mxu0 0.0
    %256 = vmatprep.subr.mxu0 0.0
    %257 = vmatpush1.msra.mxu0 0.0
    %258 = vmatprep.subr.mxu0 0.0
    %259 = vmatpush1.msra.mxu0 0.0
    %260 = vmatprep.subr.mxu0 0.0
    %261 = vmatpush1.msra.mxu0 0.0
    %262 = vmatprep.subr.mxu0 0.0
    %263 = vmatpush1.msra.mxu0 0.0
    %264 = vmatprep.subr.mxu0 0.0
    %265 = vmatpush1.msra.mxu0 0.0
    %266 = vmatprep.subr.mxu0 0.0
    %267 = vmatpush1.msra.mxu0 0.0
    %268 = vmatprep.subr.mxu0 0.0
    %269 = vmatpush1.msra.mxu0 0.0
    %270 = vmatprep.subr.mxu0 0.0
    %271 = vmatpush1.msra.mxu0 0.0
    %272 = vmatprep.subr.mxu0 0.0
    %273 = vmatpush1.msra.mxu0 0.0
    %274 = vmatprep.subr.mxu0 0.0
    %275 = vmatpush1.msra.mxu0 0.0
    %276 = vmatprep.subr.mxu0 0.0
    %277 = vmatpush1.msra.mxu0 0.0
    %278 = vmatprep.mubr.f32.mxu0 0.0
    %279 = vmatmul.mubr.f32.gmra.mrb[0].mxu0 %v212
    %v280 = vpop.f32.mrb[0].mxu0
    %v281 = vadd.f32 0.0, %v280
    %v282 = vpop.f32.mrb[0].mxu0
    %283 = vdwg.mxu0
    %v284 = vadd.f32 %v213, %v281
    %v285 = vtanh.pop %v284
    %s286 = scalar_lea.vmem [#allocation2], 8
    %v287 = vld [vmem:[%s286] sm:$0xff]
    %288 = vmatprep.subr.mxu0 0.0
    %289 = vmatpush1.msra.mxu0 %v196
    %290 = vmatprep.subr.mxu0 0.0
    %291 = vmatpush1.msra.mxu0 %v197
    %292 = vmatprep.subr.mxu0 0.0
    %293 = vmatpush1.msra.mxu0 %v198
    %294 = vmatprep.subr.mxu0 0.0
    %295 = vmatpush1.msra.mxu0 %v199
    %296 = vmatprep.subr.mxu0 0.0
    %297 = vmatpush1.msra.mxu0 %v200
    %298 = vmatprep.subr.mxu0 0.0
    %299 = vmatpush1.msra.mxu0 %v201
    %300 = vmatprep.subr.mxu0 0.0
    %301 = vmatpush1.msra.mxu0 %v202
    %302 = vmatprep.subr.mxu0 0.0
    %303 = vmatpush1.msra.mxu0 %v203
    %304 = vmatprep.subr.mxu0 0.0
    %305 = vmatpush1.msra.mxu0 %v204
    %306 = vmatprep.subr.mxu0 0.0
    %307 = vmatpush1.msra.mxu0 %v205
    %308 = vmatprep.subr.mxu0 0.0
    %309 = vmatpush1.msra.mxu0 %v206
    %310 = vmatprep.subr.mxu0 0.0
    %311 = vmatpush1.msra.mxu0 %v207
    %312 = vmatprep.subr.mxu0 0.0
    %313 = vmatpush1.msra.mxu0 %v208
    %314 = vmatprep.subr.mxu0 0.0
    %315 = vmatpush1.msra.mxu0 %v209
    %316 = vmatprep.subr.mxu0 0.0
    %317 = vmatpush1.msra.mxu0 %v210
    %318 = vmatprep.subr.mxu0 0.0
    %319 = vmatpush1.msra.mxu0 %v211
    %320 = vmatprep.subr.mxu0 0.0
    %321 = vmatpush1.msra.mxu0 0.0
    %322 = vmatprep.subr.mxu0 0.0
    %323 = vmatpush1.msra.mxu0 0.0
    %324 = vmatprep.subr.mxu0 0.0
    %325 = vmatpush1.msra.mxu0 0.0
    %326 = vmatprep.subr.mxu0 0.0
    %327 = vmatpush1.msra.mxu0 0.0
    %328 = vmatprep.subr.mxu0 0.0
    %329 = vmatpush1.msra.mxu0 0.0
    %330 = vmatprep.subr.mxu0 0.0
    %331 = vmatpush1.msra.mxu0 0.0
    %332 = vmatprep.subr.mxu0 0.0
    %333 = vmatpush1.msra.mxu0 0.0
    %334 = vmatprep.subr.mxu0 0.0
    %335 = vmatpush1.msra.mxu0 0.0
    %336 = vmatprep.subr.mxu0 0.0
    %337 = vmatpush1.msra.mxu0 0.0
    %338 = vmatprep.subr.mxu0 0.0
    %339 = vmatpush1.msra.mxu0 0.0
    %340 = vmatprep.subr.mxu0 0.0
    %341 = vmatpush1.msra.mxu0 0.0
    %342 = vmatprep.subr.mxu0 0.0
    %343 = vmatpush1.msra.mxu0 0.0
    %344 = vmatprep.subr.mxu0 0.0
    %345 = vmatpush1.msra.mxu0 0.0
    %346 = vmatprep.subr.mxu0 0.0
    %347 = vmatpush1.msra.mxu0 0.0
    %348 = vmatprep.subr.mxu0 0.0
    %349 = vmatpush1.msra.mxu0 0.0
    %350 = vmatprep.subr.mxu0 0.0
    %351 = vmatpush1.msra.mxu0 0.0
    %352 = vmatprep.mubr.f32.mxu0 0.0
    %353 = vmatmul.mubr.f32.gmra.mrb[0].mxu0 %v285
    %v354 = vpop.f32.mrb[0].mxu0
    %v355 = vadd.f32 0.0, %v354
    %v356 = vpop.f32.mrb[0].mxu0
    %357 = vdwg.mxu0
    %v358 = vadd.f32 %v287, %v355
    %v359 = vtanh.pop %v358
    %s360 = scalar_lea.vmem [#allocation2], 16
    %v361 = vld [vmem:[%s360] sm:$0xff]
    %362 = vmatprep.subr.mxu0 0.0
    %363 = vmatpush1.msra.mxu0 %v196
    %364 = vmatprep.subr.mxu0 0.0
    %365 = vmatpush1.msra.mxu0 %v197
    %366 = vmatprep.subr.mxu0 0.0
    %367 = vmatpush1.msra.mxu0 %v198
    %368 = vmatprep.subr.mxu0 0.0
    %369 = vmatpush1.msra.mxu0 %v199
    %370 = vmatprep.subr.mxu0 0.0
    %371 = vmatpush1.msra.mxu0 %v200
    %372 = vmatprep.subr.mxu0 0.0
    %373 = vmatpush1.msra.mxu0 %v201
    %374 = vmatprep.subr.mxu0 0.0
    %375 = vmatpush1.msra.mxu0 %v202
    %376 = vmatprep.subr.mxu0 0.0
    %377 = vmatpush1.msra.mxu0 %v203
    %378 = vmatprep.subr.mxu0 0.0
    %379 = vmatpush1.msra.mxu0 %v204
    %380 = vmatprep.subr.mxu0 0.0
    %381 = vmatpush1.msra.mxu0 %v205
    %382 = vmatprep.subr.mxu0 0.0
    %383 = vmatpush1.msra.mxu0 %v206
    %384 = vmatprep.subr.mxu0 0.0
    %385 = vmatpush1.msra.mxu0 %v207
    %386 = vmatprep.subr.mxu0 0.0
    %387 = vmatpush1.msra.mxu0 %v208
    %388 = vmatprep.subr.mxu0 0.0
    %389 = vmatpush1.msra.mxu0 %v209
    %390 = vmatprep.subr.mxu0 0.0
    %391 = vmatpush1.msra.mxu0 %v210
    %392 = vmatprep.subr.mxu0 0.0
    %393 = vmatpush1.msra.mxu0 %v211
    %394 = vmatprep.subr.mxu0 0.0
    %395 = vmatpush1.msra.mxu0 0.0
    %396 = vmatprep.subr.mxu0 0.0
    %397 = vmatpush1.msra.mxu0 0.0
    %398 = vmatprep.subr.mxu0 0.0
    %399 = vmatpush1.msra.mxu0 0.0
    %400 = vmatprep.subr.mxu0 0.0
    %401 = vmatpush1.msra.mxu0 0.0
    %402 = vmatprep.subr.mxu0 0.0
    %403 = vmatpush1.msra.mxu0 0.0
    %404 = vmatprep.subr.mxu0 0.0
    %405 = vmatpush1.msra.mxu0 0.0
    %406 = vmatprep.subr.mxu0 0.0
    %407 = vmatpush1.msra.mxu0 0.0
    %408 = vmatprep.subr.mxu0 0.0
    %409 = vmatpush1.msra.mxu0 0.0
    %410 = vmatprep.subr.mxu0 0.0
    %411 = vmatpush1.msra.mxu0 0.0
    %412 = vmatprep.subr.mxu0 0.0
    %413 = vmatpush1.msra.mxu0 0.0
    %414 = vmatprep.subr.mxu0 0.0
    %415 = vmatpush1.msra.mxu0 0.0
    %416 = vmatprep.subr.mxu0 0.0
    %417 = vmatpush1.msra.mxu0 0.0
    %418 = vmatprep.subr.mxu0 0.0
    %419 = vmatpush1.msra.mxu0 0.0
    %420 = vmatprep.subr.mxu0 0.0
    %421 = vmatpush1.msra.mxu0 0.0
    %422 = vmatprep.subr.mxu0 0.0
    %423 = vmatpush1.msra.mxu0 0.0
    %424 = vmatprep.subr.mxu0 0.0
    %425 = vmatpush1.msra.mxu0 0.0
    %426 = vmatprep.mubr.f32.mxu0 0.0
    %427 = vmatmul.mubr.f32.gmra.mrb[0].mxu0 %v359
    %v428 = vpop.f32.mrb[0].mxu0
    %v429 = vadd.f32 0.0, %v428
    %v430 = vpop.f32.mrb[0].mxu0
    %431 = vdwg.mxu0
    %v432 = vadd.f32 %v361, %v429
    %v433 = vtanh.pop %v432
    %s434 = scalar_lea.vmem [#allocation2], 24
    %v435 = vld [vmem:[%s434] sm:$0xff]
    %436 = vmatprep.subr.mxu0 0.0
    %437 = vmatpush1.msra.mxu0 %v196
    %438 = vmatprep.subr.mxu0 0.0
    %439 = vmatpush1.msra.mxu0 %v197
    %440 = vmatprep.subr.mxu0 0.0
    %441 = vmatpush1.msra.mxu0 %v198
    %442 = vmatprep.subr.mxu0 0.0
    %443 = vmatpush1.msra.mxu0 %v199
    %444 = vmatprep.subr.mxu0 0.0
    %445 = vmatpush1.msra.mxu0 %v200
    %446 = vmatprep.subr.mxu0 0.0
    %447 = vmatpush1.msra.mxu0 %v201
    %448 = vmatprep.subr.mxu0 0.0
    %449 = vmatpush1.msra.mxu0 %v202
    %450 = vmatprep.subr.mxu0 0.0
    %451 = vmatpush1.msra.mxu0 %v203
    %452 = vmatprep.subr.mxu0 0.0
    %453 = vmatpush1.msra.mxu0 %v204
    %454 = vmatprep.subr.mxu0 0.0
    %455 = vmatpush1.msra.mxu0 %v205
    %456 = vmatprep.subr.mxu0 0.0
    %457 = vmatpush1.msra.mxu0 %v206
    %458 = vmatprep.subr.mxu0 0.0
    %459 = vmatpush1.msra.mxu0 %v207
    %460 = vmatprep.subr.mxu0 0.0
    %461 = vmatpush1.msra.mxu0 %v208
    %462 = vmatprep.subr.mxu0 0.0
    %463 = vmatpush1.msra.mxu0 %v209
    %464 = vmatprep.subr.mxu0 0.0
    %465 = vmatpush1.msra.mxu0 %v210
    %466 = vmatprep.subr.mxu0 0.0
    %467 = vmatpush1.msra.mxu0 %v211
    %468 = vmatprep.subr.mxu0 0.0
    %469 = vmatpush1.msra.mxu0 0.0
    %470 = vmatprep.subr.mxu0 0.0
    %471 = vmatpush1.msra.mxu0 0.0
    %472 = vmatprep.subr.mxu0 0.0
    %473 = vmatpush1.msra.mxu0 0.0
    %474 = vmatprep.subr.mxu0 0.0
    %475 = vmatpush1.msra.mxu0 0.0
    %476 = vmatprep.subr.mxu0 0.0
    %477 = vmatpush1.msra.mxu0 0.0
    %478 = vmatprep.subr.mxu0 0.0
    %479 = vmatpush1.msra.mxu0 0.0
    %480 = vmatprep.subr.mxu0 0.0
    %481 = vmatpush1.msra.mxu0 0.0
    %482 = vmatprep.subr.mxu0 0.0
    %483 = vmatpush1.msra.mxu0 0.0
    %484 = vmatprep.subr.mxu0 0.0
    %485 = vmatpush1.msra.mxu0 0.0
    %486 = vmatprep.subr.mxu0 0.0
    %487 = vmatpush1.msra.mxu0 0.0
    %488 = vmatprep.subr.mxu0 0.0
    %489 = vmatpush1.msra.mxu0 0.0
    %490 = vmatprep.subr.mxu0 0.0
    %491 = vmatpush1.msra.mxu0 0.0
    %492 = vmatprep.subr.mxu0 0.0
    %493 = vmatpush1.msra.mxu0 0.0
    %494 = vmatprep.subr.mxu0 0.0
    %495 = vmatpush1.msra.mxu0 0.0
    %496 = vmatprep.subr.mxu0 0.0
    %497 = vmatpush1.msra.mxu0 0.0
    %498 = vmatprep.subr.mxu0 0.0
    %499 = vmatpush1.msra.mxu0 0.0
    %500 = vmatprep.mubr.f32.mxu0 0.0
    %501 = vmatmul.mubr.f32.gmra.mrb[0].mxu0 %v433
    %v502 = vpop.f32.mrb[0].mxu0
    %v503 = vadd.f32 0.0, %v502
    %v504 = vpop.f32.mrb[0].mxu0
    %505 = vdwg.mxu0
    %v506 = vadd.f32 %v435, %v503
    %v507 = vtanh.pop %v506
    %s508 = scalar_lea.vmem [#allocation2], 32
    %v509 = vld [vmem:[%s508] sm:$0xff]
    %510 = vmatprep.subr.mxu0 0.0
    %511 = vmatpush1.msra.mxu0 %v196
    %512 = vmatprep.subr.mxu0 0.0
    %513 = vmatpush1.msra.mxu0 %v197
    %514 = vmatprep.subr.mxu0 0.0
    %515 = vmatpush1.msra.mxu0 %v198
    %516 = vmatprep.subr.mxu0 0.0
    %517 = vmatpush1.msra.mxu0 %v199
    %518 = vmatprep.subr.mxu0 0.0
    %519 = vmatpush1.msra.mxu0 %v200
    %520 = vmatprep.subr.mxu0 0.0
    %521 = vmatpush1.msra.mxu0 %v201
    %522 = vmatprep.subr.mxu0 0.0
    %523 = vmatpush1.msra.mxu0 %v202
    %524 = vmatprep.subr.mxu0 0.0
    %525 = vmatpush1.msra.mxu0 %v203
    %526 = vmatprep.subr.mxu0 0.0
    %527 = vmatpush1.msra.mxu0 %v204
    %528 = vmatprep.subr.mxu0 0.0
    %529 = vmatpush1.msra.mxu0 %v205
    %530 = vmatprep.subr.mxu0 0.0
    %531 = vmatpush1.msra.mxu0 %v206
    %532 = vmatprep.subr.mxu0 0.0
    %533 = vmatpush1.msra.mxu0 %v207
    %534 = vmatprep.subr.mxu0 0.0
    %535 = vmatpush1.msra.mxu0 %v208
    %536 = vmatprep.subr.mxu0 0.0
    %537 = vmatpush1.msra.mxu0 %v209
    %538 = vmatprep.subr.mxu0 0.0
    %539 = vmatpush1.msra.mxu0 %v210
    %540 = vmatprep.subr.mxu0 0.0
    %541 = vmatpush1.msra.mxu0 %v211
    %542 = vmatprep.subr.mxu0 0.0
    %543 = vmatpush1.msra.mxu0 0.0
    %544 = vmatprep.subr.mxu0 0.0
    %545 = vmatpush1.msra.mxu0 0.0
    %546 = vmatprep.subr.mxu0 0.0
    %547 = vmatpush1.msra.mxu0 0.0
    %548 = vmatprep.subr.mxu0 0.0
    %549 = vmatpush1.msra.mxu0 0.0
    %550 = vmatprep.subr.mxu0 0.0
    %551 = vmatpush1.msra.mxu0 0.0
    %552 = vmatprep.subr.mxu0 0.0
    %553 = vmatpush1.msra.mxu0 0.0
    %554 = vmatprep.subr.mxu0 0.0
    %555 = vmatpush1.msra.mxu0 0.0
    %556 = vmatprep.subr.mxu0 0.0
    %557 = vmatpush1.msra.mxu0 0.0
    %558 = vmatprep.subr.mxu0 0.0
    %559 = vmatpush1.msra.mxu0 0.0
    %560 = vmatprep.subr.mxu0 0.0
    %561 = vmatpush1.msra.mxu0 0.0
    %562 = vmatprep.subr.mxu0 0.0
    %563 = vmatpush1.msra.mxu0 0.0
    %564 = vmatprep.subr.mxu0 0.0
    %565 = vmatpush1.msra.mxu0 0.0
    %566 = vmatprep.subr.mxu0 0.0
    %567 = vmatpush1.msra.mxu0 0.0
    %568 = vmatprep.subr.mxu0 0.0
    %569 = vmatpush1.msra.mxu0 0.0
    %570 = vmatprep.subr.mxu0 0.0
    %571 = vmatpush1.msra.mxu0 0.0
    %572 = vmatprep.subr.mxu0 0.0
    %573 = vmatpush1.msra.mxu0 0.0
    %574 = vmatprep.mubr.f32.mxu0 0.0
    %575 = vmatmul.mubr.f32.gmra.mrb[0].mxu0 %v507
    %v576 = vpop.f32.mrb[0].mxu0
    %v577 = vadd.f32 0.0, %v576
    %v578 = vpop.f32.mrb[0].mxu0
    %579 = vdwg.mxu0
    %v580 = vadd.f32 %v509, %v577
    %v581 = vtanh.pop %v580
    %s582 = scalar_lea.vmem [#allocation2], 40
    %v583 = vld [vmem:[%s582] sm:$0xff]
    %584 = vmatprep.subr.mxu0 0.0
    %585 = vmatpush1.msra.mxu0 %v196
    %586 = vmatprep.subr.mxu0 0.0
    %587 = vmatpush1.msra.mxu0 %v197
    %588 = vmatprep.subr.mxu0 0.0
    %589 = vmatpush1.msra.mxu0 %v198
    %590 = vmatprep.subr.mxu0 0.0
    %591 = vmatpush1.msra.mxu0 %v199
    %592 = vmatprep.subr.mxu0 0.0
    %593 = vmatpush1.msra.mxu0 %v200
    %594 = vmatprep.subr.mxu0 0.0
    %595 = vmatpush1.msra.mxu0 %v201
    %596 = vmatprep.subr.mxu0 0.0
    %597 = vmatpush1.msra.mxu0 %v202
    %598 = vmatprep.subr.mxu0 0.0
    %599 = vmatpush1.msra.mxu0 %v203
    %600 = vmatprep.subr.mxu0 0.0
    %601 = vmatpush1.msra.mxu0 %v204
    %602 = vmatprep.subr.mxu0 0.0
    %603 = vmatpush1.msra.mxu0 %v205
    %604 = vmatprep.subr.mxu0 0.0
    %605 = vmatpush1.msra.mxu0 %v206
    %606 = vmatprep.subr.mxu0 0.0
    %607 = vmatpush1.msra.mxu0 %v207
    %608 = vmatprep.subr.mxu0 0.0
    %609 = vmatpush1.msra.mxu0 %v208
    %610 = vmatprep.subr.mxu0 0.0
    %611 = vmatpush1.msra.mxu0 %v209
    %612 = vmatprep.subr.mxu0 0.0
    %613 = vmatpush1.msra.mxu0 %v210
    %614 = vmatprep.subr.mxu0 0.0
    %615 = vmatpush1.msra.mxu0 %v211
    %616 = vmatprep.subr.mxu0 0.0
    %617 = vmatpush1.msra.mxu0 0.0
    %618 = vmatprep.subr.mxu0 0.0
    %619 = vmatpush1.msra.mxu0 0.0
    %620 = vmatprep.subr.mxu0 0.0
    %621 = vmatpush1.msra.mxu0 0.0
    %622 = vmatprep.subr.mxu0 0.0
    %623 = vmatpush1.msra.mxu0 0.0
    %624 = vmatprep.subr.mxu0 0.0
    %625 = vmatpush1.msra.mxu0 0.0
    %626 = vmatprep.subr.mxu0 0.0
    %627 = vmatpush1.msra.mxu0 0.0
    %628 = vmatprep.subr.mxu0 0.0
    %629 = vmatpush1.msra.mxu0 0.0
    %630 = vmatprep.subr.mxu0 0.0
    %631 = vmatpush1.msra.mxu0 0.0
    %632 = vmatprep.subr.mxu0 0.0
    %633 = vmatpush1.msra.mxu0 0.0
    %634 = vmatprep.subr.mxu0 0.0
    %635 = vmatpush1.msra.mxu0 0.0
    %636 = vmatprep.subr.mxu0 0.0
    %637 = vmatpush1.msra.mxu0 0.0
    %638 = vmatprep.subr.mxu0 0.0
    %639 = vmatpush1.msra.mxu0 0.0
    %640 = vmatprep.subr.mxu0 0.0
    %641 = vmatpush1.msra.mxu0 0.0
    %642 = vmatprep.subr.mxu0 0.0
    %643 = vmatpush1.msra.mxu0 0.0
    %644 = vmatprep.subr.mxu0 0.0
    %645 = vmatpush1.msra.mxu0 0.0
    %646 = vmatprep.subr.mxu0 0.0
    %647 = vmatpush1.msra.mxu0 0.0
    %648 = vmatprep.mubr.f32.mxu0 0.0
    %649 = vmatmul.mubr.f32.gmra.mrb[0].mxu0 %v581
    %v650 = vpop.f32.mrb[0].mxu0
    %v651 = vadd.f32 0.0, %v650
    %v652 = vpop.f32.mrb[0].mxu0
    %653 = vdwg.mxu0
    %v654 = vadd.f32 %v583, %v651
    %v655 = vtanh.pop %v654
    %s656 = scalar_lea.vmem [#allocation2], 48
    %v657 = vld [vmem:[%s656] sm:$0xff]
    %658 = vmatprep.subr.mxu0 0.0
    %659 = vmatpush1.msra.mxu0 %v196
    %660 = vmatprep.subr.mxu0 0.0
    %661 = vmatpush1.msra.mxu0 %v197
    %662 = vmatprep.subr.mxu0 0.0
    %663 = vmatpush1.msra.mxu0 %v198
    %664 = vmatprep.subr.mxu0 0.0
    %665 = vmatpush1.msra.mxu0 %v199
    %666 = vmatprep.subr.mxu0 0.0
    %667 = vmatpush1.msra.mxu0 %v200
    %668 = vmatprep.subr.mxu0 0.0
    %669 = vmatpush1.msra.mxu0 %v201
    %670 = vmatprep.subr.mxu0 0.0
    %671 = vmatpush1.msra.mxu0 %v202
    %672 = vmatprep.subr.mxu0 0.0
    %673 = vmatpush1.msra.mxu0 %v203
    %674 = vmatprep.subr.mxu0 0.0
    %675 = vmatpush1.msra.mxu0 %v204
    %676 = vmatprep.subr.mxu0 0.0
    %677 = vmatpush1.msra.mxu0 %v205
    %678 = vmatprep.subr.mxu0 0.0
    %679 = vmatpush1.msra.mxu0 %v206
    %680 = vmatprep.subr.mxu0 0.0
    %681 = vmatpush1.msra.mxu0 %v207
    %682 = vmatprep.subr.mxu0 0.0
    %683 = vmatpush1.msra.mxu0 %v208
    %684 = vmatprep.subr.mxu0 0.0
    %685 = vmatpush1.msra.mxu0 %v209
    %686 = vmatprep.subr.mxu0 0.0
    %687 = vmatpush1.msra.mxu0 %v210
    %688 = vmatprep.subr.mxu0 0.0
    %689 = vmatpush1.msra.mxu0 %v211
    %690 = vmatprep.subr.mxu0 0.0
    %691 = vmatpush1.msra.mxu0 0.0
    %692 = vmatprep.subr.mxu0 0.0
    %693 = vmatpush1.msra.mxu0 0.0
    %694 = vmatprep.subr.mxu0 0.0
    %695 = vmatpush1.msra.mxu0 0.0
    %696 = vmatprep.subr.mxu0 0.0
    %697 = vmatpush1.msra.mxu0 0.0
    %698 = vmatprep.subr.mxu0 0.0
    %699 = vmatpush1.msra.mxu0 0.0
    %700 = vmatprep.subr.mxu0 0.0
    %701 = vmatpush1.msra.mxu0 0.0
    %702 = vmatprep.subr.mxu0 0.0
    %703 = vmatpush1.msra.mxu0 0.0
    %704 = vmatprep.subr.mxu0 0.0
    %705 = vmatpush1.msra.mxu0 0.0
    %706 = vmatprep.subr.mxu0 0.0
    %707 = vmatpush1.msra.mxu0 0.0
    %708 = vmatprep.subr.mxu0 0.0
    %709 = vmatpush1.msra.mxu0 0.0
    %710 = vmatprep.subr.mxu0 0.0
    %711 = vmatpush1.msra.mxu0 0.0
    %712 = vmatprep.subr.mxu0 0.0
    %713 = vmatpush1.msra.mxu0 0.0
    %714 = vmatprep.subr.mxu0 0.0
    %715 = vmatpush1.msra.mxu0 0.0
    %716 = vmatprep.subr.mxu0 0.0
    %717 = vmatpush1.msra.mxu0 0.0
    %718 = vmatprep.subr.mxu0 0.0
    %719 = vmatpush1.msra.mxu0 0.0
    %720 = vmatprep.subr.mxu0 0.0
    %721 = vmatpush1.msra.mxu0 0.0
    %722 = vmatprep.mubr.f32.mxu0 0.0
    %723 = vmatmul.mubr.f32.gmra.mrb[0].mxu0 %v655
    %v724 = vpop.f32.mrb[0].mxu0
    %v725 = vadd.f32 0.0, %v724
    %v726 = vpop.f32.mrb[0].mxu0
    %727 = vdwg.mxu0
    %v728 = vadd.f32 %v657, %v725
    %v729 = vtanh.pop %v728
    %s730 = scalar_lea.vmem [#allocation2], 56
    %v731 = vld [vmem:[%s730] sm:$0xff]
    %732 = vmatprep.subr.mxu0 0.0
    %733 = vmatpush1.msra.mxu0 %v196
    %734 = vmatprep.subr.mxu0 0.0
    %735 = vmatpush1.msra.mxu0 %v197
    %736 = vmatprep.subr.mxu0 0.0
    %737 = vmatpush1.msra.mxu0 %v198
    %738 = vmatprep.subr.mxu0 0.0
    %739 = vmatpush1.msra.mxu0 %v199
    %740 = vmatprep.subr.mxu0 0.0
    %741 = vmatpush1.msra.mxu0 %v200
    %742 = vmatprep.subr.mxu0 0.0
    %743 = vmatpush1.msra.mxu0 %v201
    %744 = vmatprep.subr.mxu0 0.0
    %745 = vmatpush1.msra.mxu0 %v202
    %746 = vmatprep.subr.mxu0 0.0
    %747 = vmatpush1.msra.mxu0 %v203
    %748 = vmatprep.subr.mxu0 0.0
    %749 = vmatpush1.msra.mxu0 %v204
    %750 = vmatprep.subr.mxu0 0.0
    %751 = vmatpush1.msra.mxu0 %v205
    %752 = vmatprep.subr.mxu0 0.0
    %753 = vmatpush1.msra.mxu0 %v206
    %754 = vmatprep.subr.mxu0 0.0
    %755 = vmatpush1.msra.mxu0 %v207
    %756 = vmatprep.subr.mxu0 0.0
    %757 = vmatpush1.msra.mxu0 %v208
    %758 = vmatprep.subr.mxu0 0.0
    %759 = vmatpush1.msra.mxu0 %v209
    %760 = vmatprep.subr.mxu0 0.0
    %761 = vmatpush1.msra.mxu0 %v210
    %762 = vmatprep.subr.mxu0 0.0
    %763 = vmatpush1.msra.mxu0 %v211
    %764 = vmatprep.subr.mxu0 0.0
    %765 = vmatpush1.msra.mxu0 0.0
    %766 = vmatprep.subr.mxu0 0.0
    %767 = vmatpush1.msra.mxu0 0.0
    %768 = vmatprep.subr.mxu0 0.0
    %769 = vmatpush1.msra.mxu0 0.0
    %770 = vmatprep.subr.mxu0 0.0
    %771 = vmatpush1.msra.mxu0 0.0
    %772 = vmatprep.subr.mxu0 0.0
    %773 = vmatpush1.msra.mxu0 0.0
    %774 = vmatprep.subr.mxu0 0.0
    %775 = vmatpush1.msra.mxu0 0.0
    %776 = vmatprep.subr.mxu0 0.0
    %777 = vmatpush1.msra.mxu0 0.0
    %778 = vmatprep.subr.mxu0 0.0
    %779 = vmatpush1.msra.mxu0 0.0
    %780 = vmatprep.subr.mxu0 0.0
    %781 = vmatpush1.msra.mxu0 0.0
    %782 = vmatprep.subr.mxu0 0.0
    %783 = vmatpush1.msra.mxu0 0.0
    %784 = vmatprep.subr.mxu0 0.0
    %785 = vmatpush1.msra.mxu0 0.0
    %786 = vmatprep.subr.mxu0 0.0
    %787 = vmatpush1.msra.mxu0 0.0
    %788 = vmatprep.subr.mxu0 0.0
    %789 = vmatpush1.msra.mxu0 0.0
    %790 = vmatprep.subr.mxu0 0.0
    %791 = vmatpush1.msra.mxu0 0.0
    %792 = vmatprep.subr.mxu0 0.0
    %793 = vmatpush1.msra.mxu0 0.0
    %794 = vmatprep.subr.mxu0 0.0
    %795 = vmatpush1.msra.mxu0 0.0
    %796 = vmatprep.mubr.f32.mxu0 0.0
    %797 = vmatmul.mubr.f32.gmra.mrb[0].mxu0 %v729
    %v798 = vpop.f32.mrb[0].mxu0
    %v799 = vadd.f32 0.0, %v798
    %v800 = vpop.f32.mrb[0].mxu0
    %801 = vdwg.mxu0
    %v802 = vadd.f32 %v731, %v799
    %v803 = vtanh.pop %v802
    %804 = vst [vmem:[#allocation3] sm:$0xff] %v803
    // Predicated region
    $region26: #{tpu_custom_call.1} parent=1 // pred_check
      %p805 = pneg %p32
    $region27: #{tpu_custom_call.1} parent=1 // pred_check_branch
      %807 = sbr.rel (%p805) target = $region29
    $region28: #{tpu_custom_call.1} parent=1 // pred_region
      %v808 = vld [vmem:[#allocation3] sm:$0xff]
      %809 = vst [vmem:[#allocation7] sm:$0xff] %v808
    $region29: #{tpu_custom_call.1} parent=1 // pred_fallthru
      _
    // Predicated region
    $region30: #{tpu_custom_call.1} parent=1 // pred_check
      _
    $region31: #{tpu_custom_call.1} parent=1 // pred_check_branch
      %811 = sbr.rel (0) target = $region33
    $region32: #{tpu_custom_call.1} parent=1 // pred_region
      %s813 = ssub.s32 128, 128
      %814 = vsyncadd [#allocation6], %s813
      %s816 = sshll.u32 [#allocation7], 4
      %s817 = int_to_ptr.vmem [resolvable:$true] %s816
      %819 = dma.vmem_to_hbm [thread:$0]  %s817, 128, %s4, [#allocation6]
    $region33: #{tpu_custom_call.1} parent=1 // pred_fallthru
      _
    // Predicated region
    $region34: #{tpu_custom_call.1} parent=1 // pred_check
      _
    $region35: #{tpu_custom_call.1} parent=1 // pred_check_branch
      %821 = sbr.rel (0) target = $region37
    $region36: #{tpu_custom_call.1} parent=1 // pred_region
      %822 = dma.done [#allocation6], 128
    $region37: #{tpu_custom_call.1} parent=1 // pred_fallthru
      _
    %823 = vsyncpa [#allocation5], 1
    %824 = vsyncpa [#allocation6], 1

</llo_original>
